<compile_context>
chip_gen: v7x
topology: tpu7x:2x2x1
jax: 0.10.0
libtpu: 0.0.40
codegen_flags: <defaults>
</compile_context>

<pallas_src>
import functools
import itertools
import math

import jax
import jax.numpy as jnp
from jax import lax
from jax.experimental import pallas as pl
from jax.experimental.pallas import tpu as pltpu
import numpy as np

LANE = 128   # v5e-native lane/MXU width.
             # TODO(synk): pad hidden dims to 256-multiples on v6e/v7x (2x256x256
             # MXU) once hidden_dim is non-trivial; at toy sizes 128 is enough.
SUBLANE = 8


def _round_up(x, m):
    return ((x + m - 1) // m) * m


# ----------------------------------------------------------------------------
# Mask construction (deterministic, mirrors make_mask(mask_type='densest'))
# ----------------------------------------------------------------------------
def make_mask_densest(in_features, out_features):
    mask = np.ones((out_features, in_features), dtype=np.float32)
    mask[0, :] = 1.0
    if out_features == 1:
        return mask
    row_idx = 1
    for nz in range(1, in_features):
        for zeros_in_row in itertools.combinations(range(in_features), nz):
            mask[row_idx, list(zeros_in_row)] = 0.0
            row_idx += 1
            if row_idx >= out_features:
                return mask
    return mask


def make_normal_mask(out_features, in_features, mask_num):
    # Deterministic substitute for torch.randn(generator=seed(hash(mask_num)));
    # Python's str hash is not stable across runs, so we seed on mask_num directly.
    key = jax.random.fold_in(jax.random.PRNGKey(1234), mask_num)
    return jax.random.normal(key, (out_features, in_features), dtype=jnp.float32)


def init_sparse_linear(key, in_features, out_features, mask_num,
                       mask_constant=1.0, do_normal_mask=True):
    """Replicates SparseLinear.__init__ / reset_parameters deterministically."""
    kw, kb = jax.random.split(key)
    mask = jnp.asarray(make_mask_densest(in_features, out_features))
    if do_normal_mask:
        nmask = make_normal_mask(out_features, in_features, mask_num)
    else:
        nmask = jnp.ones((out_features, in_features), dtype=jnp.float32)
    # kaiming_uniform_(a=sqrt(5)) -> bound = 1/sqrt(fan_in)
    fan_in = in_features
    w_bound = 1.0 / math.sqrt(fan_in)
    weight = jax.random.uniform(kw, (out_features, in_features),
                                minval=-w_bound, maxval=w_bound,
                                dtype=jnp.float32)
    weight = weight * mask + (1.0 - mask) * mask_constant * nmask
    b_bound = 1.0 / math.sqrt(fan_in)
    bias = jax.random.uniform(kb, (out_features,),
                              minval=-b_bound, maxval=b_bound,
                              dtype=jnp.float32)
    return {"weight": weight, "bias": bias, "mask": mask,
            "normal_mask": nmask, "mask_constant": mask_constant}


# ----------------------------------------------------------------------------
# WMLP init + InterpolatedModel parameter averaging
# ----------------------------------------------------------------------------
def wmlp_init(key, in_features, hidden_dim, out_features, num_layers):
    keys = jax.random.split(key, num_layers)
    layers = []
    if num_layers == 1:
        layers.append(init_sparse_linear(keys[0], in_features, out_features, 0))
    else:
        layers.append(init_sparse_linear(keys[0], in_features, hidden_dim, 0))
        for i in range(num_layers - 2):
            layers.append(init_sparse_linear(keys[i + 1], hidden_dim, hidden_dim, i + 1))
        layers.append(init_sparse_linear(keys[num_layers - 1], hidden_dim,
                                         out_features, num_layers - 1))
    return layers


def interpolated_model_init(key, in_features, hidden_dim, out_features,
                            num_layers, num_models=3):
    """Mirrors InterpolatedModel: average the *parameters* (weight, bias) of the
    constituent WMLPs; mask / normal_mask buffers come from the freshly built
    target WMLP (deterministic per mask_num, identical across models)."""
    keys = jax.random.split(key, num_models)
    models = [wmlp_init(k, in_features, hidden_dim, out_features, num_layers)
              for k in keys]
    target = models[0]
    interp = []
    for li in range(num_layers):
        w_avg = sum(m[li]["weight"] for m in models) / float(num_models)
        b_avg = sum(m[li]["bias"] for m in models) / float(num_models)
        lay = dict(target[li])
        lay["weight"] = w_avg
        lay["bias"] = b_avg
        interp.append(lay)
    return interp


# ----------------------------------------------------------------------------
# One-time parameter preparation (hoisted out of the forward path)
# ----------------------------------------------------------------------------
def prepare_fused_params(layers, lane_pad=LANE, weight_dtype=jnp.float32):
    """Apply the (idempotent) SparseLinear masking once, transpose to (in,out),
    and zero-pad feature dims.  The FIRST layer's input dim is kept un-padded so
    the activations never have to be lane-padded in HBM; all hidden/output dims
    are padded to `lane_pad` so every intermediate matmul is lane-dense.
    Set weight_dtype=jnp.bfloat16 on v6e/v7x for MXU-native weights (relax the
    comparison tolerance accordingly)."""
    wts, bs, dims = [], [], []
    for idx, p in enumerate(layers):
        mask = p["mask"]
        w_eff = (p["weight"] * mask
                 + (1.0 - mask) * p["mask_constant"] * p["normal_mask"])
        fout, fin = w_eff.shape
        pin = fin if idx == 0 else _round_up(fin, lane_pad)
        pout = _round_up(fout, lane_pad)
        wt = jnp.zeros((pin, pout), jnp.float32).at[:fin, :fout].set(w_eff.T)
        wt = wt.astype(weight_dtype)
        b = jnp.zeros((1, pout), jnp.float32).at[0, :fout].set(p["bias"])
        wts.append(wt)
        bs.append(b)
        dims.append((fin, fout, pin, pout))
    return {"wts": wts, "bs": bs, "dims": tuple(dims)}


# ----------------------------------------------------------------------------
# Fused Pallas kernel: chained (x @ Wt + b) with exact GELU between layers
# ----------------------------------------------------------------------------
def _make_fused_kernel(num_layers):
    inv_sqrt2 = np.float32(1.0 / math.sqrt(2.0))

    def kernel(*refs):
        x_ref = refs[0]
        wt_refs = refs[1:1 + num_layers]
        b_refs = refs[1 + num_layers:1 + 2 * num_layers]
        o_ref = refs[1 + 2 * num_layers]

        x = x_ref[...]
        for i in range(num_layers):
            w = wt_refs[i][...]
            y = jnp.dot(x.astype(w.dtype), w, preferred_element_type=jnp.float32)
            y = y + b_refs[i][...]
            if i < num_layers - 1:
                # nn.GELU() default = exact erf formulation (EUP/VPU filler
                # under MXU slack; padded columns stay exactly 0).
                y = 0.5 * y * (1.0 + lax.erf(y * inv_sqrt2))
            x = y
        o_ref[...] = x.astype(o_ref.dtype)

    return kernel


def make_forward_fn(prepared, batch_tile=512):
    """Build a jitted forward of the interpolated WMLP (norm=None path).
    Everything (flatten, batch pad, pallas_call, final slice) lives inside one
    jax.jit so there is a single dispatch and no extra HBM round-trips."""
    dims = prepared["dims"]
    num_layers = len(dims)
    fin0, fout_last = dims[0][0], dims[-1][1]
    pout_last = dims[-1][3]

    # Defensive: tiles must satisfy the (8,128) sublane rule even if a caller
    # passes e.g. batch_tile=100.
    batch_tile = _round_up(max(int(batch_tile), SUBLANE), SUBLANE)

    w_itemsize = jnp.dtype(prepared["wts"][0].dtype).itemsize
    w_bytes = sum(int(pin) * int(pout) for (_, _, pin, pout) in dims) * w_itemsize
    b_bytes = sum(int(pout) for (_, _, _, pout) in dims) * 4

    @jax.jit
    def forward(x, *params):
        wts = params[:num_layers]
        bs = params[num_layers:]

        # nn.Flatten(): keep batch dim, flatten the rest.
        x2 = x.reshape(x.shape[0], -1).astype(jnp.float32)
        B, fin = x2.shape
        assert fin == fin0, "flattened input size mismatch"

        tb = min(batch_tile, _round_up(B, SUBLANE))
        b_pad = _round_up(B, tb)
        # Only the batch dim is padded; the feature dim stays at its real width
        # (block last dim == full array dim is legal), so no 8x HBM inflation.
        x_p = jnp.pad(x2, ((0, b_pad - B), (0, 0)))

        grid = (b_pad // tb,)

        in_specs = [pl.BlockSpec((tb, fin0), lambda i: (i, 0),
                                 memory_space=pltpu.MemorySpace.VMEM)]
        # Weights/biases: constant index_map -> DMA'd once, VMEM-resident
        # across all batch-grid steps.
        # TODO(synk): pipeline_mode=pl.Buffered(1) on these specs would halve
        # resident weight VMEM (relevant on v7x's 64 MiB) once hidden_dim grows.
        for (_, _, pin, pout) in dims:
            in_specs.append(pl.BlockSpec((pin, pout), lambda i: (0, 0),
                                         memory_space=pltpu.MemorySpace.VMEM))
        for (_, _, _, pout) in dims:
            in_specs.append(pl.BlockSpec((1, pout), lambda i: (0, 0),
                                         memory_space=pltpu.MemorySpace.VMEM))
        out_specs = pl.BlockSpec((tb, pout_last), lambda i: (i, 0),
                                 memory_space=pltpu.MemorySpace.VMEM)

        # Explicit VMEM budget: double-buffered IO tiles + resident params,
        # with headroom; never below the 32 MiB scoped default.
        io_bytes = 4 * tb * (fin0 + pout_last)
        est_vmem = 2 * (w_bytes + b_bytes + io_bytes)
        vmem_limit = int(min(100 * 2 ** 20, max(4 * est_vmem, 32 * 2 ** 20)))

        flops = 2 * b_pad * sum(pin * pout for (_, _, pin, pout) in dims)
        transcendentals = b_pad * sum(pout for (_, _, _, pout) in dims[:-1])
        bytes_accessed = 4 * b_pad * (fin0 + pout_last) + w_bytes + b_bytes

        out = pl.pallas_call(
            _make_fused_kernel(num_layers),
            out_shape=jax.ShapeDtypeStruct((b_pad, pout_last), jnp.float32),
            grid=grid,
            in_specs=in_specs,
            out_specs=out_specs,
            compiler_params=pltpu.CompilerParams(
                # NOTE: on v7x switch to pltpu.CORE_PARALLEL once the batch grid
                # has >= 2 steps so both TensorCores get work.
                dimension_semantics=("parallel",),
                vmem_limit_bytes=vmem_limit),
            cost_estimate=pl.CostEstimate(flops=flops,
                                          transcendentals=transcendentals,
                                          bytes_accessed=bytes_accessed),
        )(x_p, *wts, *bs)

        # Slice fused into the same jit -> no extra dispatch / HBM copy.
        return out[:B, :fout_last]

    return functools.partial(
        lambda f, w, b, x: f(x, *w, *b),
        forward, tuple(prepared["wts"]), tuple(prepared["bs"]))


# ----------------------------------------------------------------------------
# Pure-JAX reference (per-layer masking, matches SparseLinear.forward)
# ----------------------------------------------------------------------------
def wmlp_reference(x, layers):
    x = x.reshape(x.shape[0], -1)

    def eff_w(p):
        return (p["weight"] * p["mask"]
                + (1.0 - p["mask"]) * p["mask_constant"] * p["normal_mask"])

    def gelu_exact(v):
        return 0.5 * v * (1.0 + lax.erf(v / jnp.sqrt(2.0)))

    for p in layers[:-1]:
        x = gelu_exact(jnp.dot(x, eff_w(p).T, precision=lax.Precision.HIGHEST)
                       + p["bias"])
    p = layers[-1]
    return jnp.dot(x, eff_w(p).T, precision=lax.Precision.HIGHEST) + p["bias"]


if __name__ == "__main__":
    # Small config: x of shape (batch=2, 4, 4) -> flatten -> 16 input features.
    # TODO(synk): norm='layer'/'batch' variants of MLP/WMLP are not built here
    # (InterpolatedModel always constructs its target model with norm=None).
    in_features, hidden_dim, out_features, num_layers = 16, 32, 8, 3
    batch = 2

    root = jax.random.PRNGKey(0)
    kx, kp = jax.random.split(root)
    x = jax.random.normal(kx, (batch, 4, 4), dtype=jnp.float32)

    # InterpolatedModel over 3 deterministic WMLPs (parameter averaging),
    # then one-time prep (masking + transpose + padding) hoisted out of the
    # forward path.  Keep weights f32 here (1e-5 tolerance); on v6e/v7x pass
    # weight_dtype=jnp.bfloat16 and relax the tolerance.
    layers = interpolated_model_init(kp, in_features, hidden_dim,
                                     out_features, num_layers, num_models=3)
    prepared = prepare_fused_params(layers, weight_dtype=jnp.float32)

    fwd = make_forward_fn(prepared, batch_tile=512)
    out = fwd(x)
    out = jax.block_until_ready(out)
    # Second call exercises the cached jit path (single dispatch, no retrace).
    out = jax.block_until_ready(fwd(x))

    ref = wmlp_reference(x, layers)
    assert out.shape == (batch, out_features)
    np.testing.assert_allclose(np.asarray(out), np.asarray(ref),
                               rtol=1e-5, atol=1e-5)
    print("KERNEL_OK")
</pallas_src>

<mosaic_0001>
module attributes {stable_mosaic.version = 11 : i64} {
  func.func @kernel(%arg0: i32, %arg1: memref<8x16xf32, #tpu.memory_space<vmem>>, %arg2: memref<16x128xf32, #tpu.memory_space<vmem>>, %arg3: memref<128x128xf32, #tpu.memory_space<vmem>>, %arg4: memref<128x128xf32, #tpu.memory_space<vmem>>, %arg5: memref<1x128xf32, #tpu.memory_space<vmem>>, %arg6: memref<1x128xf32, #tpu.memory_space<vmem>>, %arg7: memref<1x128xf32, #tpu.memory_space<vmem>>, %arg8: memref<8x128xf32, #tpu.memory_space<vmem>>) attributes {dimension_semantics = [#tpu.dimension_semantics<parallel>], iteration_bounds = array<i64: 1>, scalar_prefetch = 0 : i64, scratch_operands = 0 : i64, tpu.core_type = #tpu.core_type<tc>, window_params = [{transform_indices = @transform_0, window_bounds = array<i64: 8, 16>}, {pipeline_mode = #tpu.pipeline_mode<synchronous>, transform_indices = @transform_1, window_bounds = array<i64: 16, 128>}, {pipeline_mode = #tpu.pipeline_mode<synchronous>, transform_indices = @transform_2, window_bounds = array<i64: 128, 128>}, {pipeline_mode = #tpu.pipeline_mode<synchronous>, transform_indices = @transform_3, window_bounds = array<i64: 128, 128>}, {pipeline_mode = #tpu.pipeline_mode<synchronous>, transform_indices = @transform_4, window_bounds = array<i64: 1, 128>}, {pipeline_mode = #tpu.pipeline_mode<synchronous>, transform_indices = @transform_5, window_bounds = array<i64: 1, 128>}, {pipeline_mode = #tpu.pipeline_mode<synchronous>, transform_indices = @transform_6, window_bounds = array<i64: 1, 128>}, {transform_indices = @transform_7, window_bounds = array<i64: 8, 128>}]} {
    %c0 = arith.constant 0 : index
    %c0_0 = arith.constant 0 : index
    %0 = vector.load %arg1[%c0, %c0_0] : memref<8x16xf32, #tpu.memory_space<vmem>>, vector<8x16xf32>
    %c0_1 = arith.constant 0 : index
    %c0_2 = arith.constant 0 : index
    %1 = vector.load %arg2[%c0_1, %c0_2] : memref<16x128xf32, #tpu.memory_space<vmem>>, vector<16x128xf32>
    %cst = arith.constant dense<0.000000e+00> : vector<8x128xf32>
    %2 = tpu.matmul %0, %1, %cst {dimension_numbers = #tpu.dot_dimension_numbers<[1], [0], [0], [1], [0, 0, 1, 1], [], []>} : vector<8x16xf32>, vector<16x128xf32>, vector<8x128xf32> -> vector<8x128xf32>
    %c0_3 = arith.constant 0 : index
    %c0_4 = arith.constant 0 : index
    %3 = vector.load %arg5[%c0_3, %c0_4] : memref<1x128xf32, #tpu.memory_space<vmem>>, vector<1x128xf32>
    %4 = vector.broadcast %3 : vector<1x128xf32> to vector<8x128xf32>
    %5 = arith.addf %2, %4 : vector<8x128xf32>
    %cst_5 = arith.constant 5.000000e-01 : f32
    %6 = vector.broadcast %cst_5 : f32 to vector<8x128xf32>
    %7 = arith.mulf %6, %5 : vector<8x128xf32>
    %cst_6 = arith.constant 0.707106769 : f32
    %8 = vector.broadcast %cst_6 : f32 to vector<8x128xf32>
    %9 = arith.mulf %5, %8 : vector<8x128xf32>
    %10 = math.erf %9 : vector<8x128xf32>
    %cst_7 = arith.constant 1.000000e+00 : f32
    %11 = vector.broadcast %cst_7 : f32 to vector<8x128xf32>
    %12 = arith.addf %11, %10 : vector<8x128xf32>
    %13 = arith.mulf %7, %12 : vector<8x128xf32>
    %c0_8 = arith.constant 0 : index
    %c0_9 = arith.constant 0 : index
    %14 = vector.load %arg3[%c0_8, %c0_9] : memref<128x128xf32, #tpu.memory_space<vmem>>, vector<128x128xf32>
    %cst_10 = arith.constant dense<0.000000e+00> : vector<8x128xf32>
    %15 = tpu.matmul %13, %14, %cst_10 {dimension_numbers = #tpu.dot_dimension_numbers<[1], [0], [0], [1], [0, 0, 1, 1], [], []>} : vector<8x128xf32>, vector<128x128xf32>, vector<8x128xf32> -> vector<8x128xf32>
    %c0_11 = arith.constant 0 : index
    %c0_12 = arith.constant 0 : index
    %16 = vector.load %arg6[%c0_11, %c0_12] : memref<1x128xf32, #tpu.memory_space<vmem>>, vector<1x128xf32>
    %17 = vector.broadcast %16 : vector<1x128xf32> to vector<8x128xf32>
    %18 = arith.addf %15, %17 : vector<8x128xf32>
    %cst_13 = arith.constant 5.000000e-01 : f32
    %19 = vector.broadcast %cst_13 : f32 to vector<8x128xf32>
    %20 = arith.mulf %19, %18 : vector<8x128xf32>
    %cst_14 = arith.constant 0.707106769 : f32
    %21 = vector.broadcast %cst_14 : f32 to vector<8x128xf32>
    %22 = arith.mulf %18, %21 : vector<8x128xf32>
    %23 = math.erf %22 : vector<8x128xf32>
    %cst_15 = arith.constant 1.000000e+00 : f32
    %24 = vector.broadcast %cst_15 : f32 to vector<8x128xf32>
    %25 = arith.addf %24, %23 : vector<8x128xf32>
    %26 = arith.mulf %20, %25 : vector<8x128xf32>
    %c0_16 = arith.constant 0 : index
    %c0_17 = arith.constant 0 : index
    %27 = vector.load %arg4[%c0_16, %c0_17] : memref<128x128xf32, #tpu.memory_space<vmem>>, vector<128x128xf32>
    %cst_18 = arith.constant dense<0.000000e+00> : vector<8x128xf32>
    %28 = tpu.matmul %26, %27, %cst_18 {dimension_numbers = #tpu.dot_dimension_numbers<[1], [0], [0], [1], [0, 0, 1, 1], [], []>} : vector<8x128xf32>, vector<128x128xf32>, vector<8x128xf32> -> vector<8x128xf32>
    %c0_19 = arith.constant 0 : index
    %c0_20 = arith.constant 0 : index
    %29 = vector.load %arg7[%c0_19, %c0_20] : memref<1x128xf32, #tpu.memory_space<vmem>>, vector<1x128xf32>
    %30 = vector.broadcast %29 : vector<1x128xf32> to vector<8x128xf32>
    %31 = arith.addf %28, %30 : vector<8x128xf32>
    %c0_21 = arith.constant 0 : index
    %c0_22 = arith.constant 0 : index
    %32 = vector.load %arg8[%c0_21, %c0_22] : memref<8x128xf32, #tpu.memory_space<vmem>>, vector<8x128xf32>
    tpu.vector_store %arg8[%c0_21, %c0_22], %31 {strides = array<i32>} : memref<8x128xf32, #tpu.memory_space<vmem>>, vector<8x128xf32>,
    return
  }
  func.func @transform_0(%arg0: i32) -> (i32, i32) {
    %c0_i32 = arith.constant 0 : i32
    %c0_i32_0 = arith.constant 0 : i32
    return %arg0, %c0_i32 : i32, i32
  }
  func.func @transform_1(%arg0: i32) -> (i32, i32) {
    %c0_i32 = arith.constant 0 : i32
    %c0_i32_0 = arith.constant 0 : i32
    %c0_i32_1 = arith.constant 0 : i32
    return %c0_i32, %c0_i32_0 : i32, i32
  }
  func.func @transform_2(%arg0: i32) -> (i32, i32) {
    %c0_i32 = arith.constant 0 : i32
    %c0_i32_0 = arith.constant 0 : i32
    %c0_i32_1 = arith.constant 0 : i32
    return %c0_i32, %c0_i32_0 : i32, i32
  }
  func.func @transform_3(%arg0: i32) -> (i32, i32) {
    %c0_i32 = arith.constant 0 : i32
    %c0_i32_0 = arith.constant 0 : i32
    %c0_i32_1 = arith.constant 0 : i32
    return %c0_i32, %c0_i32_0 : i32, i32
  }
  func.func @transform_4(%arg0: i32) -> (i32, i32) {
    %c0_i32 = arith.constant 0 : i32
    %c0_i32_0 = arith.constant 0 : i32
    %c0_i32_1 = arith.constant 0 : i32
    return %c0_i32, %c0_i32_0 : i32, i32
  }
  func.func @transform_5(%arg0: i32) -> (i32, i32) {
    %c0_i32 = arith.constant 0 : i32
    %c0_i32_0 = arith.constant 0 : i32
    %c0_i32_1 = arith.constant 0 : i32
    return %c0_i32, %c0_i32_0 : i32, i32
  }
  func.func @transform_6(%arg0: i32) -> (i32, i32) {
    %c0_i32 = arith.constant 0 : i32
    %c0_i32_0 = arith.constant 0 : i32
    %c0_i32_1 = arith.constant 0 : i32
    return %c0_i32, %c0_i32_0 : i32, i32
  }
  func.func @transform_7(%arg0: i32) -> (i32, i32) {
    %c0_i32 = arith.constant 0 : i32
    %c0_i32_0 = arith.constant 0 : i32
    return %arg0, %c0_i32 : i32, i32
  }
}

</mosaic_0001>

<llo_original>
// kernel: forward.1
$region0: #{forward.1}
  #allocation0 [shape = 'u32[]', space=smem, size = 0x4, offset = 0x4, fixed_abs, tag = 'smem constant byte address 0x4 - core index']
  #allocation1 [shape = 'u32[144,128]{1,0:T(1,128)}', space=vmem, size = 0x12000, scoped, tag = 'internal scratch']
  %s0 = inlined_call_operand.vmem [shape: f32[8,16], index: 0, kind: input, shape index: {}]
  %s1 = inlined_call_operand.vmem [shape: f32[16,128], index: 1, kind: input, shape index: {}]
  %s2 = inlined_call_operand.hbm [shape: f32[128,128], index: 2, kind: input, shape index: {}]
  %s3 = inlined_call_operand.hbm [shape: f32[128,128], index: 3, kind: input, shape index: {}]
  %s4 = inlined_call_operand.vmem [shape: f32[1,128], index: 4, kind: input, shape index: {}]
  %s5 = inlined_call_operand.vmem [shape: f32[1,128], index: 5, kind: input, shape index: {}]
  %s6 = inlined_call_operand.vmem [shape: f32[1,128], index: 6, kind: input, shape index: {}]
  %s7 = inlined_call_operand.vmem [shape: f32[8,128], index: 7, kind: output, shape index: {}]
  %s8 = sld [smem:[#allocation0]]
  $region46: #{forward.1} parent=0
    _
  %s10 = ssub.s32 1, %s8
  %s11 = scalar_select 0, %s10, %s8
  $region1: #{forward.1} parent=0
    #allocation2 [shape = 'u8[65536]{0}', space=vmem, size = 0x10000, scoped, tag = 'input window, operand 2, single buffered']
    #allocation3 [shape = 's32[1]{0}', space=sflag, size = 0x4, scoped, tag = 'scoped memory for forward.1']
    #allocation4 [shape = 'u8[65536]{0}', space=vmem, size = 0x10000, scoped, tag = 'input window, operand 3, single buffered']
    #allocation5 [shape = 's32[1]{0}', space=sflag, size = 0x4, scoped, tag = 'scoped memory for forward.1']
    %12 = vsyncpa [#allocation3], 0
    %13 = vsyncpa [#allocation5], 0
    // Predicated region
    $region2: #{forward.1} parent=1 // pred_check
      _
    $region3: #{forward.1} parent=1 // pred_check_branch
      %15 = sbr.rel (0) target = $region5
    $region4: #{forward.1} parent=1 // pred_region
      _
    $region5: #{forward.1} parent=1 // pred_fallthru
      _
    // Predicated region
    $region6: #{forward.1} parent=1 // pred_check
      _
    $region7: #{forward.1} parent=1 // pred_check_branch
      %17 = sbr.rel (0) target = $region9
    $region8: #{forward.1} parent=1 // pred_region
      _
    $region9: #{forward.1} parent=1 // pred_fallthru
      _
    // Predicated region
    $region10: #{forward.1} parent=1 // pred_check
      _
    $region11: #{forward.1} parent=1 // pred_check_branch
      %19 = sbr.rel (0) target = $region13
    $region12: #{forward.1} parent=1 // pred_region
      %s21 = ssub.s32 2048, 2048
      %22 = vsyncadd [#allocation3], %s21
      %s23 = sshll.u32 [#allocation2], 4
      %s24 = int_to_ptr.vmem [resolvable:$true] %s23
      %29 = dma.hbm_to_vmem [thread:$0]  %s2, 2048, %s24, [#allocation3], 128, 128, 8
    $region13: #{forward.1} parent=1 // pred_fallthru
      _
    // Predicated region
    $region14: #{forward.1} parent=1 // pred_check
      _
    $region15: #{forward.1} parent=1 // pred_check_branch
      %31 = sbr.rel (0) target = $region17
    $region16: #{forward.1} parent=1 // pred_region
      %s33 = ssub.s32 2048, 2048
      %34 = vsyncadd [#allocation5], %s33
      %s35 = sshll.u32 [#allocation4], 4
      %s36 = int_to_ptr.vmem [resolvable:$true] %s35
      %41 = dma.hbm_to_vmem [thread:$0]  %s3, 2048, %s36, [#allocation5], 128, 128, 8
    $region17: #{forward.1} parent=1 // pred_fallthru
      _
    // Predicated region
    $region18: #{forward.1} parent=1 // pred_check
      _
    $region19: #{forward.1} parent=1 // pred_check_branch
      %43 = sbr.rel (0) target = $region21
    $region20: #{forward.1} parent=1 // pred_region
      _
    $region21: #{forward.1} parent=1 // pred_fallthru
      _
    // Predicated region
    $region22: #{forward.1} parent=1 // pred_check
      _
    $region23: #{forward.1} parent=1 // pred_check_branch
      %45 = sbr.rel (0) target = $region25
    $region24: #{forward.1} parent=1 // pred_region
      _
    $region25: #{forward.1} parent=1 // pred_fallthru
      _
    // Predicated region
    $region26: #{forward.1} parent=1 // pred_check
      _
    $region27: #{forward.1} parent=1 // pred_check_branch
      %47 = sbr.rel (0) target = $region29
    $region28: #{forward.1} parent=1 // pred_region
      _
    $region29: #{forward.1} parent=1 // pred_fallthru
      _
    // Predicated region
    $region30: #{forward.1} parent=1 // pred_check
      _
    $region31: #{forward.1} parent=1 // pred_check_branch
      %49 = sbr.rel (0) target = $region33
    $region32: #{forward.1} parent=1 // pred_region
      %50 = dma.done [#allocation3], 2048
    $region33: #{forward.1} parent=1 // pred_fallthru
      _
    // Predicated region
    $region34: #{forward.1} parent=1 // pred_check
      _
    $region35: #{forward.1} parent=1 // pred_check_branch
      %52 = sbr.rel (0) target = $region37
    $region36: #{forward.1} parent=1 // pred_region
      %53 = dma.done [#allocation5], 2048
    $region37: #{forward.1} parent=1 // pred_fallthru
      _
    %v54 = vld [vmem:[%s0] sm:$0xff]
    %v55 = vld [vmem:[%s1] sm:$0xff]
    %v56 = vld [vmem:[%s1 + $0x8] sm:$0xff]
    %v57 = vld [vmem:[%s4] sm:$0x1]
    %v59 = vlaneseq
    %v60 = vshrl.u32 %v59, 7
    %v61 = vsub.s32 0, %v60
    %v62 = vrot.slane %v57, %v61
    %vm64 = vcmask 130048
    %v66 = vsel %vm64, %v54, 0
    %68 = vmatprep.subr.mxu0 0.0
    %69 = vmatpush1.msra.mxu0 %v55
    %70 = vmatprep.subr.mxu0 0.0
    %71 = vmatpush1.msra.mxu0 %v56
    %72 = vmatprep.subr.mxu0 0.0
    %73 = vmatpush1.msra.mxu0 0.0
    %74 = vmatprep.subr.mxu0 0.0
    %75 = vmatpush1.msra.mxu0 0.0
    %76 = vmatprep.subr.mxu0 0.0
    %77 = vmatpush1.msra.mxu0 0.0
    %78 = vmatprep.subr.mxu0 0.0
    %79 = vmatpush1.msra.mxu0 0.0
    %80 = vmatprep.subr.mxu0 0.0
    %81 = vmatpush1.msra.mxu0 0.0
    %82 = vmatprep.subr.mxu0 0.0
    %83 = vmatpush1.msra.mxu0 0.0
    %84 = vmatprep.subr.mxu0 0.0
    %85 = vmatpush1.msra.mxu0 0.0
    %86 = vmatprep.subr.mxu0 0.0
    %87 = vmatpush1.msra.mxu0 0.0
    %88 = vmatprep.subr.mxu0 0.0
    %89 = vmatpush1.msra.mxu0 0.0
    %90 = vmatprep.subr.mxu0 0.0
    %91 = vmatpush1.msra.mxu0 0.0
    %92 = vmatprep.subr.mxu0 0.0
    %93 = vmatpush1.msra.mxu0 0.0
    %94 = vmatprep.subr.mxu0 0.0
    %95 = vmatpush1.msra.mxu0 0.0
    %96 = vmatprep.subr.mxu0 0.0
    %97 = vmatpush1.msra.mxu0 0.0
    %98 = vmatprep.subr.mxu0 0.0
    %99 = vmatpush1.msra.mxu0 0.0
    %100 = vmatprep.subr.mxu0 0.0
    %101 = vmatpush1.msra.mxu0 0.0
    %102 = vmatprep.subr.mxu0 0.0
    %103 = vmatpush1.msra.mxu0 0.0
    %104 = vmatprep.subr.mxu0 0.0
    %105 = vmatpush1.msra.mxu0 0.0
    %106 = vmatprep.subr.mxu0 0.0
    %107 = vmatpush1.msra.mxu0 0.0
    %108 = vmatprep.subr.mxu0 0.0
    %109 = vmatpush1.msra.mxu0 0.0
    %110 = vmatprep.subr.mxu0 0.0
    %111 = vmatpush1.msra.mxu0 0.0
    %112 = vmatprep.subr.mxu0 0.0
    %113 = vmatpush1.msra.mxu0 0.0
    %114 = vmatprep.subr.mxu0 0.0
    %115 = vmatpush1.msra.mxu0 0.0
    %116 = vmatprep.subr.mxu0 0.0
    %117 = vmatpush1.msra.mxu0 0.0
    %118 = vmatprep.subr.mxu0 0.0
    %119 = vmatpush1.msra.mxu0 0.0
    %120 = vmatprep.subr.mxu0 0.0
    %121 = vmatpush1.msra.mxu0 0.0
    %122 = vmatprep.subr.mxu0 0.0
    %123 = vmatpush1.msra.mxu0 0.0
    %124 = vmatprep.subr.mxu0 0.0
    %125 = vmatpush1.msra.mxu0 0.0
    %126 = vmatprep.subr.mxu0 0.0
    %127 = vmatpush1.msra.mxu0 0.0
    %128 = vmatprep.subr.mxu0 0.0
    %129 = vmatpush1.msra.mxu0 0.0
    %130 = vmatprep.subr.mxu0 0.0
    %131 = vmatpush1.msra.mxu0 0.0
    %132 = vmatprep.mubr.f32.mxu0 0.0
    %133 = vmatmul.mubr.f32.gmra.mrb[0].mxu0 %v66
    %v134 = vpop.f32.mrb[0].mxu0
    %v135 = vadd.f32 %v62, %v134
    %v136 = vpop.f32.mrb[0].mxu0
    %137 = vdwg.mxu0
    %v138 = vmul.f32 %v135, 0.5
    %v139 = vmul.f32 %v135, 0.70710677
    %v140 = verf.f32.pop %v139
    %v141 = vadd.f32 %v140, 1.0
    %v142 = vmul.f32 %v138, %v141
    %v143 = vld [vmem:[#allocation2] sm:$0xff]
    %v144 = vld [vmem:[#allocation2 + $0x8] sm:$0xff]
    %v145 = vld [vmem:[#allocation2 + $0x10] sm:$0xff]
    %v146 = vld [vmem:[#allocation2 + $0x18] sm:$0xff]
    %v147 = vld [vmem:[#allocation2 + $0x20] sm:$0xff]
    %v148 = vld [vmem:[#allocation2 + $0x28] sm:$0xff]
    %v149 = vld [vmem:[#allocation2 + $0x30] sm:$0xff]
    %v150 = vld [vmem:[#allocation2 + $0x38] sm:$0xff]
    %v151 = vld [vmem:[#allocation2 + $0x40] sm:$0xff]
    %v152 = vld [vmem:[#allocation2 + $0x48] sm:$0xff]
    %v153 = vld [vmem:[#allocation2 + $0x50] sm:$0xff]
    %v154 = vld [vmem:[#allocation2 + $0x58] sm:$0xff]
    %v155 = vld [vmem:[#allocation2 + $0x60] sm:$0xff]
    %v156 = vld [vmem:[#allocation2 + $0x68] sm:$0xff]
    %v157 = vld [vmem:[#allocation2 + $0x70] sm:$0xff]
    %v158 = vld [vmem:[#allocation2 + $0x78] sm:$0xff]
    %v159 = vld [vmem:[%s5] sm:$0x1]
    %v161 = vlaneseq
    %v162 = vshrl.u32 %v161, 7
    %v163 = vsub.s32 0, %v162
    %v164 = vrot.slane %v159, %v163
    %166 = vmatprep.subr.mxu0 0.0
    %167 = vmatpush1.msra.mxu0 %v143
    %168 = vmatprep.subr.mxu0 0.0
    %169 = vmatpush1.msra.mxu0 %v144
    %170 = vmatprep.subr.mxu0 0.0
    %171 = vmatpush1.msra.mxu0 %v145
    %172 = vmatprep.subr.mxu0 0.0
    %173 = vmatpush1.msra.mxu0 %v146
    %174 = vmatprep.subr.mxu0 0.0
    %175 = vmatpush1.msra.mxu0 %v147
    %176 = vmatprep.subr.mxu0 0.0
    %177 = vmatpush1.msra.mxu0 %v148
    %178 = vmatprep.subr.mxu0 0.0
    %179 = vmatpush1.msra.mxu0 %v149
    %180 = vmatprep.subr.mxu0 0.0
    %181 = vmatpush1.msra.mxu0 %v150
    %182 = vmatprep.subr.mxu0 0.0
    %183 = vmatpush1.msra.mxu0 %v151
    %184 = vmatprep.subr.mxu0 0.0
    %185 = vmatpush1.msra.mxu0 %v152
    %186 = vmatprep.subr.mxu0 0.0
    %187 = vmatpush1.msra.mxu0 %v153
    %188 = vmatprep.subr.mxu0 0.0
    %189 = vmatpush1.msra.mxu0 %v154
    %190 = vmatprep.subr.mxu0 0.0
    %191 = vmatpush1.msra.mxu0 %v155
    %192 = vmatprep.subr.mxu0 0.0
    %193 = vmatpush1.msra.mxu0 %v156
    %194 = vmatprep.subr.mxu0 0.0
    %195 = vmatpush1.msra.mxu0 %v157
    %196 = vmatprep.subr.mxu0 0.0
    %197 = vmatpush1.msra.mxu0 %v158
    %198 = vmatprep.subr.mxu0 0.0
    %199 = vmatpush1.msra.mxu0 0.0
    %200 = vmatprep.subr.mxu0 0.0
    %201 = vmatpush1.msra.mxu0 0.0
    %202 = vmatprep.subr.mxu0 0.0
    %203 = vmatpush1.msra.mxu0 0.0
    %204 = vmatprep.subr.mxu0 0.0
    %205 = vmatpush1.msra.mxu0 0.0
    %206 = vmatprep.subr.mxu0 0.0
    %207 = vmatpush1.msra.mxu0 0.0
    %208 = vmatprep.subr.mxu0 0.0
    %209 = vmatpush1.msra.mxu0 0.0
    %210 = vmatprep.subr.mxu0 0.0
    %211 = vmatpush1.msra.mxu0 0.0
    %212 = vmatprep.subr.mxu0 0.0
    %213 = vmatpush1.msra.mxu0 0.0
    %214 = vmatprep.subr.mxu0 0.0
    %215 = vmatpush1.msra.mxu0 0.0
    %216 = vmatprep.subr.mxu0 0.0
    %217 = vmatpush1.msra.mxu0 0.0
    %218 = vmatprep.subr.mxu0 0.0
    %219 = vmatpush1.msra.mxu0 0.0
    %220 = vmatprep.subr.mxu0 0.0
    %221 = vmatpush1.msra.mxu0 0.0
    %222 = vmatprep.subr.mxu0 0.0
    %223 = vmatpush1.msra.mxu0 0.0
    %224 = vmatprep.subr.mxu0 0.0
    %225 = vmatpush1.msra.mxu0 0.0
    %226 = vmatprep.subr.mxu0 0.0
    %227 = vmatpush1.msra.mxu0 0.0
    %228 = vmatprep.subr.mxu0 0.0
    %229 = vmatpush1.msra.mxu0 0.0
    %230 = vmatprep.mubr.f32.mxu0 0.0
    %231 = vmatmul.mubr.f32.gmra.mrb[0].mxu0 %v142
    %v232 = vpop.f32.mrb[0].mxu0
    %v233 = vadd.f32 %v164, %v232
    %v234 = vpop.f32.mrb[0].mxu0
    %235 = vdwg.mxu0
    %v236 = vmul.f32 %v233, 0.5
    %v237 = vmul.f32 %v233, 0.70710677
    %v238 = verf.f32.pop %v237
    %v239 = vadd.f32 %v238, 1.0
    %v240 = vmul.f32 %v236, %v239
    %v241 = vld [vmem:[#allocation4] sm:$0xff]
    %v242 = vld [vmem:[#allocation4 + $0x8] sm:$0xff]
    %v243 = vld [vmem:[#allocation4 + $0x10] sm:$0xff]
    %v244 = vld [vmem:[#allocation4 + $0x18] sm:$0xff]
    %v245 = vld [vmem:[#allocation4 + $0x20] sm:$0xff]
    %v246 = vld [vmem:[#allocation4 + $0x28] sm:$0xff]
    %v247 = vld [vmem:[#allocation4 + $0x30] sm:$0xff]
    %v248 = vld [vmem:[#allocation4 + $0x38] sm:$0xff]
    %v249 = vld [vmem:[#allocation4 + $0x40] sm:$0xff]
    %v250 = vld [vmem:[#allocation4 + $0x48] sm:$0xff]
    %v251 = vld [vmem:[#allocation4 + $0x50] sm:$0xff]
    %v252 = vld [vmem:[#allocation4 + $0x58] sm:$0xff]
    %v253 = vld [vmem:[#allocation4 + $0x60] sm:$0xff]
    %v254 = vld [vmem:[#allocation4 + $0x68] sm:$0xff]
    %v255 = vld [vmem:[#allocation4 + $0x70] sm:$0xff]
    %v256 = vld [vmem:[#allocation4 + $0x78] sm:$0xff]
    %v257 = vld [vmem:[%s6] sm:$0x1]
    %v259 = vlaneseq
    %v260 = vshrl.u32 %v259, 7
    %v261 = vsub.s32 0, %v260
    %v262 = vrot.slane %v257, %v261
    %264 = vmatprep.subr.mxu0 0.0
    %265 = vmatpush1.msra.mxu0 %v241
    %266 = vmatprep.subr.mxu0 0.0
    %267 = vmatpush1.msra.mxu0 %v242
    %268 = vmatprep.subr.mxu0 0.0
    %269 = vmatpush1.msra.mxu0 %v243
    %270 = vmatprep.subr.mxu0 0.0
    %271 = vmatpush1.msra.mxu0 %v244
    %272 = vmatprep.subr.mxu0 0.0
    %273 = vmatpush1.msra.mxu0 %v245
    %274 = vmatprep.subr.mxu0 0.0
    %275 = vmatpush1.msra.mxu0 %v246
    %276 = vmatprep.subr.mxu0 0.0
    %277 = vmatpush1.msra.mxu0 %v247
    %278 = vmatprep.subr.mxu0 0.0
    %279 = vmatpush1.msra.mxu0 %v248
    %280 = vmatprep.subr.mxu0 0.0
    %281 = vmatpush1.msra.mxu0 %v249
    %282 = vmatprep.subr.mxu0 0.0
    %283 = vmatpush1.msra.mxu0 %v250
    %284 = vmatprep.subr.mxu0 0.0
    %285 = vmatpush1.msra.mxu0 %v251
    %286 = vmatprep.subr.mxu0 0.0
    %287 = vmatpush1.msra.mxu0 %v252
    %288 = vmatprep.subr.mxu0 0.0
    %289 = vmatpush1.msra.mxu0 %v253
    %290 = vmatprep.subr.mxu0 0.0
    %291 = vmatpush1.msra.mxu0 %v254
    %292 = vmatprep.subr.mxu0 0.0
    %293 = vmatpush1.msra.mxu0 %v255
    %294 = vmatprep.subr.mxu0 0.0
    %295 = vmatpush1.msra.mxu0 %v256
    %296 = vmatprep.subr.mxu0 0.0
    %297 = vmatpush1.msra.mxu0 0.0
    %298 = vmatprep.subr.mxu0 0.0
    %299 = vmatpush1.msra.mxu0 0.0
    %300 = vmatprep.subr.mxu0 0.0
    %301 = vmatpush1.msra.mxu0 0.0
    %302 = vmatprep.subr.mxu0 0.0
    %303 = vmatpush1.msra.mxu0 0.0
    %304 = vmatprep.subr.mxu0 0.0
    %305 = vmatpush1.msra.mxu0 0.0
    %306 = vmatprep.subr.mxu0 0.0
    %307 = vmatpush1.msra.mxu0 0.0
    %308 = vmatprep.subr.mxu0 0.0
    %309 = vmatpush1.msra.mxu0 0.0
    %310 = vmatprep.subr.mxu0 0.0
    %311 = vmatpush1.msra.mxu0 0.0
    %312 = vmatprep.subr.mxu0 0.0
    %313 = vmatpush1.msra.mxu0 0.0
    %314 = vmatprep.subr.mxu0 0.0
    %315 = vmatpush1.msra.mxu0 0.0
    %316 = vmatprep.subr.mxu0 0.0
    %317 = vmatpush1.msra.mxu0 0.0
    %318 = vmatprep.subr.mxu0 0.0
    %319 = vmatpush1.msra.mxu0 0.0
    %320 = vmatprep.subr.mxu0 0.0
    %321 = vmatpush1.msra.mxu0 0.0
    %322 = vmatprep.subr.mxu0 0.0
    %323 = vmatpush1.msra.mxu0 0.0
    %324 = vmatprep.subr.mxu0 0.0
    %325 = vmatpush1.msra.mxu0 0.0
    %326 = vmatprep.subr.mxu0 0.0
    %327 = vmatpush1.msra.mxu0 0.0
    %328 = vmatprep.mubr.f32.mxu0 0.0
    %329 = vmatmul.mubr.f32.gmra.mrb[0].mxu0 %v240
    %v330 = vpop.f32.mrb[0].mxu0
    %v331 = vadd.f32 %v262, %v330
    %v332 = vpop.f32.mrb[0].mxu0
    %333 = vdwg.mxu0
    %334 = vst [vmem:[%s7] sm:$0xff] %v331
    // Predicated region
    $region38: #{forward.1} parent=1 // pred_check
      _
    $region39: #{forward.1} parent=1 // pred_check_branch
      %336 = sbr.rel (0) target = $region41
    $region40: #{forward.1} parent=1 // pred_region
      _
    $region41: #{forward.1} parent=1 // pred_fallthru
      _
    // Predicated region
    $region42: #{forward.1} parent=1 // pred_check
      _
    $region43: #{forward.1} parent=1 // pred_check_branch
      %338 = sbr.rel (0) target = $region45
    $region44: #{forward.1} parent=1 // pred_region
      _
    $region45: #{forward.1} parent=1 // pred_fallthru
      _
    %339 = vsyncpa [#allocation3], 1
    %340 = vsyncpa [#allocation5], 1

</llo_original>
